<compile_context>
chip_gen: v7x
topology: tpu7x:2x2x1
jax: 0.10.0
libtpu: 0.0.40
codegen_flags: <defaults>
</compile_context>

<pallas_src>
import jax
import jax.numpy as jnp
from jax.experimental import pallas as pl
from jax.experimental.pallas import tpu as pltpu


def _round_up(x, m):
    return ((x + m - 1) // m) * m


# ----------------------------- kernels --------------------------------------

def _linear_kernel_tiled(x_ref, w_ref, b_ref, o_ref):
    """One (i, j) output tile; K (reduction) is the innermost grid axis.

    Accumulates directly into the f32 output tile (resident across k since the
    output index_map ignores k) — no separate VMEM accumulator.
    """
    k = pl.program_id(2)

    @pl.when(k == 0)
    def _():
        o_ref[...] = jnp.zeros_like(o_ref)

    # x: (tm, tk), w: (tk, tn) — canonical contraction, MXU-native RHS layout.
    o_ref[...] += jnp.dot(x_ref[...], w_ref[...],
                          preferred_element_type=jnp.float32)

    @pl.when(k == pl.num_programs(2) - 1)
    def _():
        o_ref[...] += b_ref[...]          # bias added once, in f32


def _linear_kernel_single(x_ref, w_ref, b_ref, o_ref):
    """Tiny-shape fast path: whole problem in one MXU pass, no grid."""
    o_ref[...] = jnp.dot(x_ref[...], w_ref[...],
                         preferred_element_type=jnp.float32) + b_ref[...]


# --------------------------- wrapper / prep ---------------------------------

def prepare_linear_params(weight, bias, *, tn_max=512, tk_max=1024,
                          compute_dtype=jnp.float32):
    """One-time parameter preparation (amortized across forward calls).

    weight: (OUT, IN) PyTorch nn.Linear layout.
    Returns (w_t, b_p, meta) where w_t is the weight transposed to (Kp, Np)
    and zero-padded to lane-dense tile boundaries, and b_p is bias as (1, Np).
    """
    OUT, IN = weight.shape
    tn = min(tn_max, _round_up(OUT, 128))
    tk = min(tk_max, _round_up(IN, 128))
    Np = _round_up(OUT, tn)
    Kp = _round_up(IN, tk)

    w_t = jnp.pad(weight.T, ((0, Kp - IN), (0, Np - OUT))).astype(compute_dtype)
    b_p = jnp.pad(bias, (0, Np - OUT)).reshape(1, Np).astype(jnp.float32)

    meta = dict(out=OUT, in_=IN, tn=tn, tk=tk, np_=Np, kp=Kp,
                compute_dtype=jnp.dtype(compute_dtype))
    return w_t, b_p, meta


def linear_forward(x, w_t, b_p, meta, *, tm_max=512):
    """y = x @ weight.T + bias, like torch.nn.Linear.

    x:   (B, IN) float32
    w_t: (Kp, Np) pre-transposed / pre-padded weight (from prepare_linear_params)
    b_p: (1, Np)  pre-padded bias
    """
    B, IN = x.shape
    assert IN == meta["in_"], "x feature dim must match weight IN"
    OUT = meta["out"]
    tn, tk = meta["tn"], meta["tk"]
    Np, Kp = meta["np_"], meta["kp"]
    compute_dtype = meta["compute_dtype"]

    # bf16 operands pack two rows per sublane -> round tm to a multiple of 16.
    sublane = 16 if compute_dtype == jnp.dtype(jnp.bfloat16) else 8
    tm = min(tm_max, _round_up(B, sublane))
    Bp = _round_up(B, tm)

    xp = x
    if Bp != B or Kp != IN:
        xp = jnp.pad(x, ((0, Bp - B), (0, Kp - IN)))
    xp = xp.astype(compute_dtype)

    grid = (Bp // tm, Np // tn, Kp // tk)

    cost = pl.CostEstimate(
        flops=2 * Bp * Kp * Np,
        transcendentals=0,
        bytes_accessed=(xp.size * xp.dtype.itemsize
                        + w_t.size * w_t.dtype.itemsize
                        + b_p.size * 4
                        + Bp * Np * 4),
    )

    if grid == (1, 1, 1):
        # Whole problem fits a single tile: skip the tiled pipeline entirely.
        out = pl.pallas_call(
            _linear_kernel_single,
            out_shape=jax.ShapeDtypeStruct((Bp, Np), jnp.float32),
            cost_estimate=cost,
        )(xp, w_t, b_p)
        return out[:B, :OUT]

    out = pl.pallas_call(
        _linear_kernel_tiled,
        out_shape=jax.ShapeDtypeStruct((Bp, Np), jnp.float32),
        grid_spec=pltpu.PrefetchScalarGridSpec(
            num_scalar_prefetch=0,
            grid=grid,
            in_specs=[
                pl.BlockSpec((tm, tk), lambda i, j, k: (i, k)),   # x tile
                pl.BlockSpec((tk, tn), lambda i, j, k: (k, j)),   # weight (IN, OUT)
                pl.BlockSpec((1, tn), lambda i, j, k: (0, j)),    # bias tile
            ],
            out_specs=pl.BlockSpec((tm, tn), lambda i, j, k: (i, j)),
        ),
        compiler_params=pltpu.CompilerParams(
            # M/N parallel (megacore-shardable; at small B the split naturally
            # lands on N so each v7x core streams half the weight), K last.
            dimension_semantics=("parallel", "parallel", "arbitrary"),
            vmem_limit_bytes=32 * 1024 * 1024,
        ),
        cost_estimate=cost,
    )(xp, w_t, b_p)

    return out[:B, :OUT]


# ------------------------------- demo ---------------------------------------

if __name__ == "__main__":
    # Shapes consistent with LinearRegressor(in_=32, out_=8).
    B, IN, OUT = 8, 32, 8

    key = jax.random.PRNGKey(0)
    kx, kw, kb = jax.random.split(key, 3)

    x = jax.random.normal(kx, (B, IN), dtype=jnp.float32)
    bound = 1.0 / (IN ** 0.5)                 # mimic nn.Linear uniform init bound
    weight = jax.random.uniform(kw, (OUT, IN), dtype=jnp.float32,
                                minval=-bound, maxval=bound)
    bias = jax.random.uniform(kb, (OUT,), dtype=jnp.float32,
                              minval=-bound, maxval=bound)

    w_t, b_p, meta = prepare_linear_params(weight, bias)
    y = linear_forward(x, w_t, b_p, meta)
    jax.block_until_ready(y)

    y_ref = x @ weight.T + bias
    assert y.shape == (B, OUT)
    assert jnp.allclose(y, y_ref, atol=1e-5, rtol=1e-5)

    # Also exercise the tiled multi-block path (padding on every axis, K split).
    B2, IN2, OUT2 = 520, 1100, 200
    k2x, k2w, k2b = jax.random.split(jax.random.PRNGKey(1), 3)
    x2 = jax.random.normal(k2x, (B2, IN2), dtype=jnp.float32)
    w2 = jax.random.normal(k2w, (OUT2, IN2), dtype=jnp.float32) * 0.02
    b2 = jax.random.normal(k2b, (OUT2,), dtype=jnp.float32) * 0.02

    w2_t, b2_p, meta2 = prepare_linear_params(w2, b2)
    y2 = linear_forward(x2, w2_t, b2_p, meta2)
    jax.block_until_ready(y2)
    y2_ref = x2 @ w2.T + b2
    assert y2.shape == (B2, OUT2)
    assert jnp.allclose(y2, y2_ref, atol=1e-4, rtol=1e-4)

    print("KERNEL_OK")
</pallas_src>

<mosaic_0001>
module attributes {stable_mosaic.version = 11 : i64} {
  func.func @_linear_kernel_single(%arg0: memref<8x128xf32, #tpu.memory_space<vmem>>, %arg1: memref<128x128xf32, #tpu.memory_space<vmem>>, %arg2: memref<1x128xf32, #tpu.memory_space<vmem>>, %arg3: memref<8x128xf32, #tpu.memory_space<vmem>>) attributes {dimension_semantics = [], scalar_prefetch = 0 : i64, scratch_operands = 0 : i64, tpu.core_type = #tpu.core_type<tc>} {
    %c0 = arith.constant 0 : index
    %c0_0 = arith.constant 0 : index
    %0 = vector.load %arg0[%c0, %c0_0] : memref<8x128xf32, #tpu.memory_space<vmem>>, vector<8x128xf32>
    %c0_1 = arith.constant 0 : index
    %c0_2 = arith.constant 0 : index
    %1 = vector.load %arg1[%c0_1, %c0_2] : memref<128x128xf32, #tpu.memory_space<vmem>>, vector<128x128xf32>
    %cst = arith.constant dense<0.000000e+00> : vector<8x128xf32>
    %2 = tpu.matmul %0, %1, %cst {dimension_numbers = #tpu.dot_dimension_numbers<[1], [0], [0], [1], [0, 0, 1, 1], [], []>} : vector<8x128xf32>, vector<128x128xf32>, vector<8x128xf32> -> vector<8x128xf32>
    %c0_3 = arith.constant 0 : index
    %c0_4 = arith.constant 0 : index
    %3 = vector.load %arg2[%c0_3, %c0_4] : memref<1x128xf32, #tpu.memory_space<vmem>>, vector<1x128xf32>
    %4 = vector.broadcast %3 : vector<1x128xf32> to vector<8x128xf32>
    %5 = arith.addf %2, %4 : vector<8x128xf32>
    %c0_5 = arith.constant 0 : index
    %c0_6 = arith.constant 0 : index
    %6 = vector.load %arg3[%c0_5, %c0_6] : memref<8x128xf32, #tpu.memory_space<vmem>>, vector<8x128xf32>
    tpu.vector_store %arg3[%c0_5, %c0_6], %5 {strides = array<i32>} : memref<8x128xf32, #tpu.memory_space<vmem>>, vector<8x128xf32>,
    return
  }
}

</mosaic_0001>

<llo_original>
// kernel: tpu_custom_call.1
$region0: #{tpu_custom_call.1}
  #allocation0 [shape = 'u32[]', space=smem, size = 0x4, offset = 0x4, fixed_abs, tag = 'smem constant byte address 0x4 - core index']
  #allocation1 [shape = 'u32[144,128]{1,0:T(1,128)}', space=vmem, size = 0x12000, scoped, tag = 'internal scratch']
  %s0 = inlined_call_operand.hbm [shape: f32[8,128], index: 0, kind: input, shape index: {}]
  %s1 = inlined_call_operand.hbm [shape: f32[128,128], index: 1, kind: input, shape index: {}]
  %s2 = inlined_call_operand.vmem [shape: f32[1,128], index: 2, kind: input, shape index: {}]
  %s3 = inlined_call_operand.hbm [shape: f32[8,128], index: 3, kind: output, shape index: {}]
  %s4 = sld [smem:[#allocation0]]
  $region30: #{tpu_custom_call.1} parent=0
    _
  %s6 = ssub.s32 1, %s4
  %s7 = scalar_select 0, %s6, %s4
  $region1: #{tpu_custom_call.1} parent=0
    #allocation2 [shape = 'u8[4096]{0}', space=vmem, size = 0x1000, scoped, tag = 'input window, operand 0, single buffered']
    #allocation3 [shape = 's32[1]{0}', space=sflag, size = 0x4, scoped, tag = 'scoped memory for tpu_custom_call.1']
    #allocation4 [shape = 's32[1]{0}', space=sflag, size = 0x4, scoped, tag = 'scoped memory for tpu_custom_call.1']
    #allocation5 [shape = 'u8[65536]{0}', space=vmem, size = 0x10000, scoped, tag = 'input window, operand 1, single buffered']
    #allocation6 [shape = 's32[1]{0}', space=sflag, size = 0x4, scoped, tag = 'scoped memory for tpu_custom_call.1']
    #allocation7 [shape = 'u8[4096]{0}', space=vmem, size = 0x1000, scoped, tag = 'output window, operand 0, single buffered']
    %8 = vsyncpa [#allocation3], 0
    %9 = vsyncpa [#allocation6], 0
    %10 = vsyncpa [#allocation4], 0
    // Predicated region
    $region2: #{tpu_custom_call.1} parent=1 // pred_check
      _
    $region3: #{tpu_custom_call.1} parent=1 // pred_check_branch
      %12 = sbr.rel (0) target = $region5
    $region4: #{tpu_custom_call.1} parent=1 // pred_region
      %s14 = ssub.s32 128, 128
      %15 = vsyncadd [#allocation3], %s14
      %s17 = sshll.u32 [#allocation2], 4
      %s18 = int_to_ptr.vmem [resolvable:$true] %s17
      %20 = dma.hbm_to_vmem [thread:$0]  %s0, 128, %s18, [#allocation3]
    $region5: #{tpu_custom_call.1} parent=1 // pred_fallthru
      _
    // Predicated region
    $region6: #{tpu_custom_call.1} parent=1 // pred_check
      _
    $region7: #{tpu_custom_call.1} parent=1 // pred_check_branch
      %22 = sbr.rel (0) target = $region9
    $region8: #{tpu_custom_call.1} parent=1 // pred_region
      %s24 = ssub.s32 2048, 2048
      %25 = vsyncadd [#allocation6], %s24
      %s26 = sshll.u32 [#allocation5], 4
      %s27 = int_to_ptr.vmem [resolvable:$true] %s26
      %32 = dma.hbm_to_vmem [thread:$0]  %s1, 2048, %s27, [#allocation6], 128, 128, 8
    $region9: #{tpu_custom_call.1} parent=1 // pred_fallthru
      _
    // Predicated region
    $region10: #{tpu_custom_call.1} parent=1 // pred_check
      _
    $region11: #{tpu_custom_call.1} parent=1 // pred_check_branch
      %34 = sbr.rel (0) target = $region13
    $region12: #{tpu_custom_call.1} parent=1 // pred_region
      _
    $region13: #{tpu_custom_call.1} parent=1 // pred_fallthru
      _
    // Predicated region
    $region14: #{tpu_custom_call.1} parent=1 // pred_check
      _
    $region15: #{tpu_custom_call.1} parent=1 // pred_check_branch
      %36 = sbr.rel (0) target = $region17
    $region16: #{tpu_custom_call.1} parent=1 // pred_region
      %37 = dma.done [#allocation3], 128
    $region17: #{tpu_custom_call.1} parent=1 // pred_fallthru
      _
    // Predicated region
    $region18: #{tpu_custom_call.1} parent=1 // pred_check
      _
    $region19: #{tpu_custom_call.1} parent=1 // pred_check_branch
      %39 = sbr.rel (0) target = $region21
    $region20: #{tpu_custom_call.1} parent=1 // pred_region
      %40 = dma.done [#allocation6], 2048
    $region21: #{tpu_custom_call.1} parent=1 // pred_fallthru
      _
    %v41 = vld [vmem:[#allocation2] sm:$0xff]
    %v42 = vld [vmem:[#allocation5] sm:$0xff]
    %v43 = vld [vmem:[#allocation5 + $0x8] sm:$0xff]
    %v44 = vld [vmem:[#allocation5 + $0x10] sm:$0xff]
    %v45 = vld [vmem:[#allocation5 + $0x18] sm:$0xff]
    %v46 = vld [vmem:[#allocation5 + $0x20] sm:$0xff]
    %v47 = vld [vmem:[#allocation5 + $0x28] sm:$0xff]
    %v48 = vld [vmem:[#allocation5 + $0x30] sm:$0xff]
    %v49 = vld [vmem:[#allocation5 + $0x38] sm:$0xff]
    %v50 = vld [vmem:[#allocation5 + $0x40] sm:$0xff]
    %v51 = vld [vmem:[#allocation5 + $0x48] sm:$0xff]
    %v52 = vld [vmem:[#allocation5 + $0x50] sm:$0xff]
    %v53 = vld [vmem:[#allocation5 + $0x58] sm:$0xff]
    %v54 = vld [vmem:[#allocation5 + $0x60] sm:$0xff]
    %v55 = vld [vmem:[#allocation5 + $0x68] sm:$0xff]
    %v56 = vld [vmem:[#allocation5 + $0x70] sm:$0xff]
    %v57 = vld [vmem:[#allocation5 + $0x78] sm:$0xff]
    %v58 = vld [vmem:[%s2] sm:$0x1]
    %v60 = vlaneseq
    %v61 = vshrl.u32 %v60, 7
    %v62 = vsub.s32 0, %v61
    %v63 = vrot.slane %v58, %v62
    %65 = vmatprep.subr.mxu0 0.0
    %66 = vmatpush1.msra.mxu0 %v42
    %67 = vmatprep.subr.mxu0 0.0
    %68 = vmatpush1.msra.mxu0 %v43
    %69 = vmatprep.subr.mxu0 0.0
    %70 = vmatpush1.msra.mxu0 %v44
    %71 = vmatprep.subr.mxu0 0.0
    %72 = vmatpush1.msra.mxu0 %v45
    %73 = vmatprep.subr.mxu0 0.0
    %74 = vmatpush1.msra.mxu0 %v46
    %75 = vmatprep.subr.mxu0 0.0
    %76 = vmatpush1.msra.mxu0 %v47
    %77 = vmatprep.subr.mxu0 0.0
    %78 = vmatpush1.msra.mxu0 %v48
    %79 = vmatprep.subr.mxu0 0.0
    %80 = vmatpush1.msra.mxu0 %v49
    %81 = vmatprep.subr.mxu0 0.0
    %82 = vmatpush1.msra.mxu0 %v50
    %83 = vmatprep.subr.mxu0 0.0
    %84 = vmatpush1.msra.mxu0 %v51
    %85 = vmatprep.subr.mxu0 0.0
    %86 = vmatpush1.msra.mxu0 %v52
    %87 = vmatprep.subr.mxu0 0.0
    %88 = vmatpush1.msra.mxu0 %v53
    %89 = vmatprep.subr.mxu0 0.0
    %90 = vmatpush1.msra.mxu0 %v54
    %91 = vmatprep.subr.mxu0 0.0
    %92 = vmatpush1.msra.mxu0 %v55
    %93 = vmatprep.subr.mxu0 0.0
    %94 = vmatpush1.msra.mxu0 %v56
    %95 = vmatprep.subr.mxu0 0.0
    %96 = vmatpush1.msra.mxu0 %v57
    %97 = vmatprep.subr.mxu0 0.0
    %98 = vmatpush1.msra.mxu0 0.0
    %99 = vmatprep.subr.mxu0 0.0
    %100 = vmatpush1.msra.mxu0 0.0
    %101 = vmatprep.subr.mxu0 0.0
    %102 = vmatpush1.msra.mxu0 0.0
    %103 = vmatprep.subr.mxu0 0.0
    %104 = vmatpush1.msra.mxu0 0.0
    %105 = vmatprep.subr.mxu0 0.0
    %106 = vmatpush1.msra.mxu0 0.0
    %107 = vmatprep.subr.mxu0 0.0
    %108 = vmatpush1.msra.mxu0 0.0
    %109 = vmatprep.subr.mxu0 0.0
    %110 = vmatpush1.msra.mxu0 0.0
    %111 = vmatprep.subr.mxu0 0.0
    %112 = vmatpush1.msra.mxu0 0.0
    %113 = vmatprep.subr.mxu0 0.0
    %114 = vmatpush1.msra.mxu0 0.0
    %115 = vmatprep.subr.mxu0 0.0
    %116 = vmatpush1.msra.mxu0 0.0
    %117 = vmatprep.subr.mxu0 0.0
    %118 = vmatpush1.msra.mxu0 0.0
    %119 = vmatprep.subr.mxu0 0.0
    %120 = vmatpush1.msra.mxu0 0.0
    %121 = vmatprep.subr.mxu0 0.0
    %122 = vmatpush1.msra.mxu0 0.0
    %123 = vmatprep.subr.mxu0 0.0
    %124 = vmatpush1.msra.mxu0 0.0
    %125 = vmatprep.subr.mxu0 0.0
    %126 = vmatpush1.msra.mxu0 0.0
    %127 = vmatprep.subr.mxu0 0.0
    %128 = vmatpush1.msra.mxu0 0.0
    %129 = vmatprep.mubr.f32.mxu0 0.0
    %130 = vmatmul.mubr.f32.gmra.mrb[0].mxu0 %v41
    %v131 = vpop.f32.mrb[0].mxu0
    %v132 = vadd.f32 %v63, %v131
    %v133 = vpop.f32.mrb[0].mxu0
    %134 = vdwg.mxu0
    %135 = vst [vmem:[#allocation7] sm:$0xff] %v132
    // Predicated region
    $region22: #{tpu_custom_call.1} parent=1 // pred_check
      _
    $region23: #{tpu_custom_call.1} parent=1 // pred_check_branch
      %137 = sbr.rel (0) target = $region25
    $region24: #{tpu_custom_call.1} parent=1 // pred_region
      %s139 = ssub.s32 128, 128
      %140 = vsyncadd [#allocation4], %s139
      %s142 = sshll.u32 [#allocation7], 4
      %s143 = int_to_ptr.vmem [resolvable:$true] %s142
      %145 = dma.vmem_to_hbm [thread:$0]  %s143, 128, %s3, [#allocation4]
    $region25: #{tpu_custom_call.1} parent=1 // pred_fallthru
      _
    // Predicated region
    $region26: #{tpu_custom_call.1} parent=1 // pred_check
      _
    $region27: #{tpu_custom_call.1} parent=1 // pred_check_branch
      %147 = sbr.rel (0) target = $region29
    $region28: #{tpu_custom_call.1} parent=1 // pred_region
      %148 = dma.done [#allocation4], 128
    $region29: #{tpu_custom_call.1} parent=1 // pred_fallthru
      _
    %149 = vsyncpa [#allocation3], 1
    %150 = vsyncpa [#allocation6], 1
    %151 = vsyncpa [#allocation4], 1

</llo_original>
